<compile_context>
chip_gen: v7x
topology: tpu7x:2x2x1
jax: 0.10.0
libtpu: 0.0.40
codegen_flags: <defaults>
</compile_context>

<pallas_src>
import functools

import jax
import jax.numpy as jnp
from jax.experimental import pallas as pl
from jax.experimental.pallas import tpu as pltpu


def _round_up(n, m):
    return ((n + m - 1) // m) * m


def _vmem_capacity_bytes():
    """Physical VMEM of the local TPU generation; conservative fallback (v7x)."""
    try:
        cap = int(pltpu.get_tpu_info().vmem_capacity_bytes)
        if cap >= (16 << 20):
            return cap
    except Exception:
        pass
    return 64 << 20


def _footprint_bytes(tb, sc, D, H, x_itemsize, has_mask):
    """Estimate of all simultaneously-live VMEM for one grid step."""
    su = lambda n: _round_up(max(int(n), 1), 8)      # sublane padding
    la = lambda n: _round_up(max(int(n), 1), 128)    # lane padding
    f32 = 4
    total = 0
    total += 2 * tb * su(sc) * la(D) * x_itemsize    # x tile, double-buffered
    total += su(D) * la(H) * x_itemsize              # W, single-buffered (resident)
    total += 2 * 2 * su(1) * la(H) * f32             # bias + v
    if has_mask:
        total += 2 * su(tb) * la(sc) * f32           # mask tile, double-buffered
    total += 2 * su(tb) * la(D) * f32                # output, double-buffered
    total += su(tb) * la(D) * f32                    # pooled accumulator scratch
    total += su(tb * sc) * la(H) * f32               # proj intermediate (f32)
    total += tb * su(sc) * la(D) * f32               # x * p product (f32)
    total += 4 * su(tb) * la(sc) * f32               # scores / p / temporaries
    return total


def _choose_batch_tile(B, tb_max):
    """Pick tb: minimize batch padding first (avoids a padded HBM copy of x),
    then prefer >= 2 grid steps when B is large (v7x has 2 TensorCores),
    then prefer the largest tile (fewer grid steps, denser MXU M)."""
    candidates = set()
    if B <= tb_max:
        candidates.add(B)                 # full-extent tile: zero batch padding
    t = 8
    while t <= tb_max:
        candidates.add(t)
        t += 8
    best_key, best_t = None, min(candidates)
    for t in sorted(candidates):
        bp = _round_up(B, t)
        pad = bp - B
        n_tiles = bp // t
        single_tile_penalty = 1 if (B >= 16 and n_tiles < 2) else 0
        key = (pad, single_tile_penalty, -t)
        if best_key is None or key < best_key:
            best_key, best_t = key, t
    return best_t


def _resident_spec(shape):
    """BlockSpec for an operand whose block never changes across the grid.
    Single-buffered when the running JAX supports pipeline_mode (saves VMEM)."""
    idx = lambda i, j: (0, 0)
    if hasattr(pl, "Buffered"):
        try:
            return pl.BlockSpec(shape, idx, pipeline_mode=pl.Buffered(1))
        except TypeError:
            pass
    return pl.BlockSpec(shape, idx)


def _attention_pooling_kernel(*refs, s_valid, s_chunk, mask_pad_s, has_mask):
    """Grid = (batch tiles, sequence chunks).  Online softmax over sequence chunks."""
    if has_mask:
        x_ref, w_ref, b_ref, v_ref, mask_ref, out_ref, m_sc, l_sc, acc_sc = refs
    else:
        x_ref, w_ref, b_ref, v_ref, out_ref, m_sc, l_sc, acc_sc = refs
        mask_ref = None

    j = pl.program_id(1)
    nj = pl.num_programs(1)
    tb, sc, d = x_ref.shape
    h = w_ref.shape[1]

    @pl.when(j == 0)
    def _init():
        m_sc[...] = jnp.full(m_sc.shape, -jnp.inf, m_sc.dtype)
        l_sc[...] = jnp.zeros(l_sc.shape, l_sc.dtype)
        acc_sc[...] = jnp.zeros(acc_sc.shape, acc_sc.dtype)

    x = x_ref[...]                                           # (tb, sc, D), matmul dtype

    # Projection for this sequence chunk: one (tb*sc, D) @ (D, H) MXU GEMM, f32 acc.
    # (reshape is a free relabeling when sc % 8 == 0, which the wrapper enforces for
    #  multi-chunk runs; for a single full-extent chunk it is at worst a VMEM relayout,
    #  which is far cheaper than a padded HBM copy of x.)
    proj = jnp.tanh(
        jnp.dot(x.reshape(tb * sc, d), w_ref[...],
                preferred_element_type=jnp.float32) + b_ref[...])        # (tb*sc, H)

    # Scores: VPU multiply + lane reduce over H -> (tb, sc) f32, sc on lanes.
    scores = jnp.sum(proj.reshape(tb, sc, h) * v_ref[...], axis=-1)

    if mask_ref is not None:
        # Faithful to the PyTorch module: masked_fill(mask == 0, 1e-9), NOT -inf.
        scores = jnp.where(mask_ref[...] == 0.0, jnp.float32(1e-9), scores)

    if mask_pad_s:
        # Wrapper-side sequence padding gets a true -inf-like fill (zero softmax
        # mass) -- intentionally distinct from the user-visible 1e-9 fill above.
        pos = j * s_chunk + jax.lax.broadcasted_iota(jnp.int32, scores.shape, 1)
        scores = jnp.where(pos < s_valid, scores, jnp.float32(-1e30))

    # Online (flash-style) softmax + rescaled pooled accumulator.
    m_prev = m_sc[...]                                       # (tb, 1)
    m_new = jnp.maximum(m_prev, jnp.max(scores, axis=-1, keepdims=True))
    alpha = jnp.exp(m_prev - m_new)                          # (tb, 1)
    p = jnp.exp(scores - m_new)                              # (tb, sc) f32
    l_sc[...] = alpha * l_sc[...] + jnp.sum(p, axis=-1, keepdims=True)
    m_sc[...] = m_new
    # x stays in its (possibly bf16) matmul dtype; bf16*f32 promotes per-vreg, so no
    # materialized f32 copy of the x tile; accumulation is f32.
    acc_sc[...] = alpha * acc_sc[...] + jnp.sum(x * p[:, :, None], axis=1)

    @pl.when(j == nj - 1)
    def _finalize():
        out_ref[...] = (acc_sc[...] *
                        pl.reciprocal(l_sc[...], approx=True)).astype(out_ref.dtype)


def attention_pooling(x, w, b, v, mask=None, *,
                      matmul_dtype=jnp.float32, batch_tile=None, s_chunk=None):
    """x: (B, S, D); w: (D, H) (pre-transposed); b: (H,); v: (H,); mask: (B, S) or None.

    matmul_dtype=jnp.bfloat16 halves x HBM traffic (worth it on v5e/v6e/v7x alike);
    tanh / softmax / pooling accumulation stay in f32.
    """
    B, S, D = x.shape
    H = w.shape[1]
    matmul_dtype = jnp.dtype(matmul_dtype)
    itemsize = matmul_dtype.itemsize
    has_mask = mask is not None

    # ---- Per-generation VMEM budget (v5e/v6e 128 MiB, v7x 64 MiB physical). ----
    cap = _vmem_capacity_bytes()
    vmem_limit = min(int(cap * 0.75), 100 << 20)
    budget = int(vmem_limit * 0.75)         # headroom for compiler temporaries

    # ---- Sequence chunk: whole sequence if it fits, else online-softmax chunks. ----
    if s_chunk is not None:
        sc = max(1, int(s_chunk))
    else:
        sc = S
        while sc > 8 and _footprint_bytes(8, sc, D, H, itemsize, has_mask) > budget:
            sc = max(8, (sc // 2) // 8 * 8)
    if sc >= S:
        sc, Sp = S, S                       # single full-extent chunk, no S padding
    else:
        sc = max(8, (sc // 8) * 8)          # (8,128) sublane rule for non-full blocks
        Sp = _round_up(S, sc)

    # ---- Batch tile. ----
    if batch_tile is not None:
        tb = max(1, int(batch_tile))
        if tb >= B:
            tb = B
        elif tb % 8:
            tb = max(8, (tb // 8) * 8)
    else:
        tb_max = 8
        while tb_max < 256 and _footprint_bytes(
                tb_max * 2, sc, D, H, itemsize, has_mask) <= budget:
            tb_max *= 2
        tb = _choose_batch_tile(B, tb_max)
    Bp = _round_up(B, tb)

    # ---- Build kernel inputs; copy x only if padding is genuinely required. ----
    need_pad = (Bp > B) or (Sp > S)
    if need_pad:
        xk = jnp.zeros((Bp, Sp, D), matmul_dtype).at[:B, :S, :].set(
            x.astype(matmul_dtype))
    elif x.dtype != matmul_dtype:
        xk = x.astype(matmul_dtype)
    else:
        xk = x
    wk = w if w.dtype == matmul_dtype else w.astype(matmul_dtype)
    bk = b.reshape(1, H).astype(jnp.float32)
    vk = v.reshape(1, H).astype(jnp.float32)

    in_specs = [
        pl.BlockSpec((tb, sc, D), lambda i, j: (i, j, 0)),   # x batch/seq tile
        _resident_spec((D, H)),                              # W (resident)
        _resident_spec((1, H)),                              # bias
        _resident_spec((1, H)),                              # v
    ]
    args = [xk, wk, bk, vk]
    if has_mask:
        if need_pad:
            # Padded rows/positions get mask=1 so the faithful 1e-9 fill does not
            # apply there; padded sequence positions are killed with -1e30 in-kernel.
            mk = jnp.ones((Bp, Sp), jnp.float32).at[:B, :S].set(
                mask.astype(jnp.float32))
        else:
            mk = mask.astype(jnp.float32)
        in_specs.append(pl.BlockSpec((tb, sc), lambda i, j: (i, j)))
        args.append(mk)

    kernel = functools.partial(
        _attention_pooling_kernel,
        s_valid=S, s_chunk=sc, mask_pad_s=(Sp > S), has_mask=has_mask)

    out = pl.pallas_call(
        kernel,
        out_shape=jax.ShapeDtypeStruct((Bp, D), jnp.float32),
        grid_spec=pltpu.PrefetchScalarGridSpec(
            num_scalar_prefetch=0,
            grid=(Bp // tb, Sp // sc),
            in_specs=in_specs,
            out_specs=pl.BlockSpec((tb, D), lambda i, j: (i, 0)),
            scratch_shapes=[
                pltpu.VMEM((tb, 1), jnp.float32),    # running max
                pltpu.VMEM((tb, 1), jnp.float32),    # running softmax denom
                pltpu.VMEM((tb, D), jnp.float32),    # pooled accumulator
            ],
        ),
        compiler_params=pltpu.CompilerParams(
            dimension_semantics=("parallel", "arbitrary"),   # batch parallel, S reduce
            vmem_limit_bytes=vmem_limit,
        ),
    )(*args)

    return out[:B] if Bp > B else out


def attention_pooling_ref(x, w, b, v, mask=None):
    """Pure-JAX reference mirroring the PyTorch forward."""
    x_proj = jnp.tanh(jnp.einsum("bsd,dh->bsh", x, w) + b)
    scores = jnp.einsum("bsh,h->bs", x_proj, v)
    if mask is not None:
        scores = jnp.where(mask == 0, 1e-9, scores)
    weights = jax.nn.softmax(scores, axis=1)
    return jnp.sum(x * weights[..., None], axis=1)


def init_params(key, input_dim, hidden_dim):
    kw, kv = jax.random.split(key)
    # xavier_uniform_ on torch weight (hidden_dim, input_dim)
    limit = (6.0 / (input_dim + hidden_dim)) ** 0.5
    w_t = jax.random.uniform(kw, (hidden_dim, input_dim),
                             minval=-limit, maxval=limit, dtype=jnp.float32)
    w = w_t.T                                    # stored as (D, H) for x @ W
    b = jnp.zeros((hidden_dim,), dtype=jnp.float32)
    v = 0.1 * jax.random.normal(kv, (hidden_dim,), dtype=jnp.float32)
    return w, b, v


if __name__ == "__main__":
    # --- Small primary shapes (no padding, zero-copy x path). ---
    B, S, D, H = 2, 8, 32, 16
    key = jax.random.PRNGKey(0)
    kx, kp, km = jax.random.split(key, 3)
    x = jax.random.normal(kx, (B, S, D), dtype=jnp.float32)
    w, b, v = init_params(kp, D, H)
    mask = (jax.random.uniform(km, (B, S)) > 0.2).astype(jnp.float32)

    out = jax.block_until_ready(attention_pooling(x, w, b, v, mask))
    ref = attention_pooling_ref(x, w, b, v, mask)
    assert out.shape == (B, D)
    assert jnp.allclose(out, ref, atol=2e-3, rtol=2e-3), (out, ref)

    # mask=None path (no mask DMA, separate kernel variant)
    out2 = jax.block_until_ready(attention_pooling(x, w, b, v, None))
    ref2 = attention_pooling_ref(x, w, b, v, None)
    assert jnp.allclose(out2, ref2, atol=2e-3, rtol=2e-3), (out2, ref2)

    # bf16 matmul-input path (bandwidth lever on v5e/v6e/v7x); compare against a
    # reference with bf16-quantized x / W.
    out3 = jax.block_until_ready(
        attention_pooling(x, w, b, v, mask, matmul_dtype=jnp.bfloat16))
    ref3 = attention_pooling_ref(x.astype(jnp.bfloat16).astype(jnp.float32),
                                 w.astype(jnp.bfloat16).astype(jnp.float32), b, v, mask)
    assert jnp.allclose(out3, ref3, atol=5e-3, rtol=5e-3), (out3, ref3)

    # --- Multi-tile grid + online-softmax sequence chunking + ragged batch/seq. ---
    B2, S2, D2, H2 = 20, 20, 48, 40
    kx2, kp2, km2 = jax.random.split(jax.random.PRNGKey(1), 3)
    x2 = jax.random.normal(kx2, (B2, S2, D2), dtype=jnp.float32)
    w2, b2, v2 = init_params(kp2, D2, H2)
    mask2 = (jax.random.uniform(km2, (B2, S2)) > 0.3).astype(jnp.float32)
    out4 = jax.block_until_ready(
        attention_pooling(x2, w2, b2, v2, mask2, batch_tile=8, s_chunk=8))
    ref4 = attention_pooling_ref(x2, w2, b2, v2, mask2)
    assert out4.shape == (B2, D2)
    assert jnp.allclose(out4, ref4, atol=2e-3, rtol=2e-3), (out4, ref4)

    print("KERNEL_OK")
</pallas_src>

<mosaic_0001>
module attributes {stable_mosaic.version = 11 : i64} {
  func.func @_attention_pooling_kernel(%arg0: i32, %arg1: i32, %arg2: memref<2x8x32xf32, #tpu.memory_space<vmem>>, %arg3: memref<32x16xf32, #tpu.memory_space<vmem>>, %arg4: memref<1x16xf32, #tpu.memory_space<vmem>>, %arg5: memref<1x16xf32, #tpu.memory_space<vmem>>, %arg6: memref<2x8xf32, #tpu.memory_space<vmem>>, %arg7: memref<2x32xf32, #tpu.memory_space<vmem>>, %arg8: memref<2x1xf32, #tpu.memory_space<vmem>>, %arg9: memref<2x1xf32, #tpu.memory_space<vmem>>, %arg10: memref<2x32xf32, #tpu.memory_space<vmem>>) attributes {dimension_semantics = [#tpu.dimension_semantics<parallel>, #tpu.dimension_semantics<arbitrary>], iteration_bounds = array<i64: 1, 1>, scalar_prefetch = 0 : i64, scratch_operands = 3 : i64, tpu.core_type = #tpu.core_type<tc>, window_params = [{transform_indices = @transform_0, window_bounds = array<i64: 2, 8, 32>}, {pipeline_mode = #tpu.pipeline_mode<synchronous>, transform_indices = @transform_1, window_bounds = array<i64: 32, 16>}, {pipeline_mode = #tpu.pipeline_mode<synchronous>, transform_indices = @transform_2, window_bounds = array<i64: 1, 16>}, {pipeline_mode = #tpu.pipeline_mode<synchronous>, transform_indices = @transform_3, window_bounds = array<i64: 1, 16>}, {transform_indices = @transform_4, window_bounds = array<i64: 2, 8>}, {transform_indices = @transform_5, window_bounds = array<i64: 2, 32>}]} {
    %c0_i32 = arith.constant 0 : i32
    %0 = arith.cmpi eq, %arg1, %c0_i32 : i32
    %1 = arith.extui %0 : i1 to i32
    %c0_i32_0 = arith.constant 0 : i32
    %2 = arith.cmpi ne, %1, %c0_i32_0 : i32
    scf.if %2 {
      %cst_31 = arith.constant 0xFF800000 : f32
      %50 = vector.broadcast %cst_31 : f32 to vector<2x1xf32>
      %c0_32 = arith.constant 0 : index
      %c0_33 = arith.constant 0 : index
      %51 = vector.load %arg8[%c0_32, %c0_33] : memref<2x1xf32, #tpu.memory_space<vmem>>, vector<2x1xf32>
      tpu.vector_store %arg8[%c0_32, %c0_33], %50 {strides = array<i32>} : memref<2x1xf32, #tpu.memory_space<vmem>>, vector<2x1xf32>,
      %cst_34 = arith.constant 0.000000e+00 : f32
      %52 = vector.broadcast %cst_34 : f32 to vector<2x1xf32>
      %c0_35 = arith.constant 0 : index
      %c0_36 = arith.constant 0 : index
      %53 = vector.load %arg9[%c0_35, %c0_36] : memref<2x1xf32, #tpu.memory_space<vmem>>, vector<2x1xf32>
      tpu.vector_store %arg9[%c0_35, %c0_36], %52 {strides = array<i32>} : memref<2x1xf32, #tpu.memory_space<vmem>>, vector<2x1xf32>,
      %cst_37 = arith.constant 0.000000e+00 : f32
      %54 = vector.broadcast %cst_37 : f32 to vector<2x32xf32>
      %c0_38 = arith.constant 0 : index
      %c0_39 = arith.constant 0 : index
      %55 = vector.load %arg10[%c0_38, %c0_39] : memref<2x32xf32, #tpu.memory_space<vmem>>, vector<2x32xf32>
      tpu.vector_store %arg10[%c0_38, %c0_39], %54 {strides = array<i32>} : memref<2x32xf32, #tpu.memory_space<vmem>>, vector<2x32xf32>,
    } else {
    }
    %c0 = arith.constant 0 : index
    %c0_1 = arith.constant 0 : index
    %c0_2 = arith.constant 0 : index
    %3 = vector.load %arg2[%c0, %c0_1, %c0_2] : memref<2x8x32xf32, #tpu.memory_space<vmem>>, vector<2x8x32xf32>
    %4 = vector.shape_cast %3 : vector<2x8x32xf32> to vector<16x32xf32>
    %c0_3 = arith.constant 0 : index
    %c0_4 = arith.constant 0 : index
    %5 = vector.load %arg3[%c0_3, %c0_4] : memref<32x16xf32, #tpu.memory_space<vmem>>, vector<32x16xf32>
    %cst = arith.constant dense<0.000000e+00> : vector<16x16xf32>
    %6 = tpu.matmul %4, %5, %cst {dimension_numbers = #tpu.dot_dimension_numbers<[1], [0], [0], [1], [0, 0, 1, 1], [], []>} : vector<16x32xf32>, vector<32x16xf32>, vector<16x16xf32> -> vector<16x16xf32>
    %c0_5 = arith.constant 0 : index
    %c0_6 = arith.constant 0 : index
    %7 = vector.load %arg4[%c0_5, %c0_6] : memref<1x16xf32, #tpu.memory_space<vmem>>, vector<1x16xf32>
    %8 = vector.broadcast %7 : vector<1x16xf32> to vector<16x16xf32>
    %9 = arith.addf %6, %8 : vector<16x16xf32>
    %10 = math.tanh %9 : vector<16x16xf32>
    %11 = vector.shape_cast %10 : vector<16x16xf32> to vector<2x8x16xf32>
    %c0_7 = arith.constant 0 : index
    %c0_8 = arith.constant 0 : index
    %12 = vector.load %arg5[%c0_7, %c0_8] : memref<1x16xf32, #tpu.memory_space<vmem>>, vector<1x16xf32>
    %13 = vector.shape_cast %12 : vector<1x16xf32> to vector<1x1x16xf32>
    %14 = vector.broadcast %13 : vector<1x1x16xf32> to vector<2x8x16xf32>
    %15 = arith.mulf %11, %14 : vector<2x8x16xf32>
    %cst_9 = arith.constant dense<0.000000e+00> : vector<2x8xf32>
    %16 = vector.multi_reduction <add>, %15, %cst_9 [2] : vector<2x8x16xf32> to vector<2x8xf32>
    %c0_10 = arith.constant 0 : index
    %c0_11 = arith.constant 0 : index
    %17 = vector.load %arg6[%c0_10, %c0_11] : memref<2x8xf32, #tpu.memory_space<vmem>>, vector<2x8xf32>
    %cst_12 = arith.constant 0.000000e+00 : f32
    %18 = vector.broadcast %cst_12 : f32 to vector<2x8xf32>
    %19 = arith.cmpf oeq, %17, %18 : vector<2x8xf32>
    %cst_13 = arith.constant 9.99999971E-10 : f32
    %20 = vector.broadcast %cst_13 : f32 to vector<2x8xf32>
    %21 = arith.select %19, %20, %16 : vector<2x8xi1>, vector<2x8xf32>
    %c0_14 = arith.constant 0 : index
    %c0_15 = arith.constant 0 : index
    %22 = vector.load %arg8[%c0_14, %c0_15] : memref<2x1xf32, #tpu.memory_space<vmem>>, vector<2x1xf32>
    %cst_16 = arith.constant dense<0xFF800000> : vector<2xf32>
    %23 = vector.multi_reduction <maximumf>, %21, %cst_16 [1] : vector<2x8xf32> to vector<2xf32>
    %24 = vector.shape_cast %23 : vector<2xf32> to vector<2x1xf32>
    %25 = arith.maximumf %22, %24 : vector<2x1xf32>
    %26 = arith.subf %22, %25 : vector<2x1xf32>
    %27 = math.exp %26 : vector<2x1xf32>
    %28 = vector.broadcast %25 : vector<2x1xf32> to vector<2x8xf32>
    %29 = arith.subf %21, %28 : vector<2x8xf32>
    %30 = math.exp %29 : vector<2x8xf32>
    %c0_17 = arith.constant 0 : index
    %c0_18 = arith.constant 0 : index
    %31 = vector.load %arg9[%c0_17, %c0_18] : memref<2x1xf32, #tpu.memory_space<vmem>>, vector<2x1xf32>
    %32 = arith.mulf %27, %31 : vector<2x1xf32>
    %cst_19 = arith.constant dense<0.000000e+00> : vector<2xf32>
    %33 = vector.multi_reduction <add>, %30, %cst_19 [1] : vector<2x8xf32> to vector<2xf32>
    %34 = vector.shape_cast %33 : vector<2xf32> to vector<2x1xf32>
    %35 = arith.addf %32, %34 : vector<2x1xf32>
    %c0_20 = arith.constant 0 : index
    %c0_21 = arith.constant 0 : index
    %36 = vector.load %arg9[%c0_20, %c0_21] : memref<2x1xf32, #tpu.memory_space<vmem>>, vector<2x1xf32>
    tpu.vector_store %arg9[%c0_20, %c0_21], %35 {strides = array<i32>} : memref<2x1xf32, #tpu.memory_space<vmem>>, vector<2x1xf32>,
    %c0_22 = arith.constant 0 : index
    %c0_23 = arith.constant 0 : index
    %37 = vector.load %arg8[%c0_22, %c0_23] : memref<2x1xf32, #tpu.memory_space<vmem>>, vector<2x1xf32>
    tpu.vector_store %arg8[%c0_22, %c0_23], %25 {strides = array<i32>} : memref<2x1xf32, #tpu.memory_space<vmem>>, vector<2x1xf32>,
    %c0_24 = arith.constant 0 : index
    %c0_25 = arith.constant 0 : index
    %38 = vector.load %arg10[%c0_24, %c0_25] : memref<2x32xf32, #tpu.memory_space<vmem>>, vector<2x32xf32>
    %39 = vector.broadcast %27 : vector<2x1xf32> to vector<2x32xf32>
    %40 = arith.mulf %39, %38 : vector<2x32xf32>
    %41 = vector.shape_cast %30 : vector<2x8xf32> to vector<2x8x1xf32>
    %42 = vector.broadcast %41 : vector<2x8x1xf32> to vector<2x8x32xf32>
    %43 = arith.mulf %3, %42 : vector<2x8x32xf32>
    %cst_26 = arith.constant dense<0.000000e+00> : vector<2x32xf32>
    %44 = vector.multi_reduction <add>, %43, %cst_26 [1] : vector<2x8x32xf32> to vector<2x32xf32>
    %45 = arith.addf %40, %44 : vector<2x32xf32>
    %c0_27 = arith.constant 0 : index
    %c0_28 = arith.constant 0 : index
    %46 = vector.load %arg10[%c0_27, %c0_28] : memref<2x32xf32, #tpu.memory_space<vmem>>, vector<2x32xf32>
    tpu.vector_store %arg10[%c0_27, %c0_28], %45 {strides = array<i32>} : memref<2x32xf32, #tpu.memory_space<vmem>>, vector<2x32xf32>,
    %c0_i32_29 = arith.constant 0 : i32
    %47 = arith.cmpi eq, %arg1, %c0_i32_29 : i32
    %48 = arith.extui %47 : i1 to i32
    %c0_i32_30 = arith.constant 0 : i32
    %49 = arith.cmpi ne, %48, %c0_i32_30 : i32
    scf.if %49 {
      %c0_31 = arith.constant 0 : index
      %c0_32 = arith.constant 0 : index
      %50 = vector.load %arg10[%c0_31, %c0_32] : memref<2x32xf32, #tpu.memory_space<vmem>>, vector<2x32xf32>
      %c0_33 = arith.constant 0 : index
      %c0_34 = arith.constant 0 : index
      %51 = vector.load %arg9[%c0_33, %c0_34] : memref<2x1xf32, #tpu.memory_space<vmem>>, vector<2x1xf32>
      %52 = tpu.reciprocal %51 {approx = true} : vector<2x1xf32> -> vector<2x1xf32>
      %53 = vector.broadcast %52 : vector<2x1xf32> to vector<2x32xf32>
      %54 = arith.mulf %50, %53 : vector<2x32xf32>
      %c0_35 = arith.constant 0 : index
      %c0_36 = arith.constant 0 : index
      %55 = vector.load %arg7[%c0_35, %c0_36] : memref<2x32xf32, #tpu.memory_space<vmem>>, vector<2x32xf32>
      tpu.vector_store %arg7[%c0_35, %c0_36], %54 {strides = array<i32>} : memref<2x32xf32, #tpu.memory_space<vmem>>, vector<2x32xf32>,
    } else {
    }
    return
  }
  func.func @transform_0(%arg0: i32, %arg1: i32) -> (i32, i32, i32) {
    %c0_i32 = arith.constant 0 : i32
    %c0_i32_0 = arith.constant 0 : i32
    return %arg0, %arg1, %c0_i32 : i32, i32, i32
  }
  func.func @transform_1(%arg0: i32, %arg1: i32) -> (i32, i32) {
    %c0_i32 = arith.constant 0 : i32
    %c0_i32_0 = arith.constant 0 : i32
    %c0_i32_1 = arith.constant 0 : i32
    return %c0_i32, %c0_i32_0 : i32, i32
  }
  func.func @transform_2(%arg0: i32, %arg1: i32) -> (i32, i32) {
    %c0_i32 = arith.constant 0 : i32
    %c0_i32_0 = arith.constant 0 : i32
    %c0_i32_1 = arith.constant 0 : i32
    return %c0_i32, %c0_i32_0 : i32, i32
  }
  func.func @transform_3(%arg0: i32, %arg1: i32) -> (i32, i32) {
    %c0_i32 = arith.constant 0 : i32
    %c0_i32_0 = arith.constant 0 : i32
    %c0_i32_1 = arith.constant 0 : i32
    return %c0_i32, %c0_i32_0 : i32, i32
  }
  func.func @transform_4(%arg0: i32, %arg1: i32) -> (i32, i32) {
    %c0_i32 = arith.constant 0 : i32
    return %arg0, %arg1 : i32, i32
  }
  func.func @transform_5(%arg0: i32, %arg1: i32) -> (i32, i32) {
    %c0_i32 = arith.constant 0 : i32
    %c0_i32_0 = arith.constant 0 : i32
    return %arg0, %c0_i32 : i32, i32
  }
}

</mosaic_0001>

<llo_original>
// kernel: tpu_custom_call.1
$region0: #{tpu_custom_call.1}
  #allocation0 [shape = 'u32[]', space=smem, size = 0x4, offset = 0x4, fixed_abs, tag = 'smem constant byte address 0x4 - core index']
  #allocation1 [shape = 'u32[144,128]{1,0:T(1,128)}', space=vmem, size = 0x12000, scoped, tag = 'internal scratch']
  #allocation2 [shape = 'f32[2,1]{1,0:T(2,128)}', space=vmem, size = 0x400, scoped, tag = 'scratch operand']
  #allocation3 [shape = 'f32[2,1]{1,0:T(2,128)}', space=vmem, size = 0x400, scoped, tag = 'scratch operand']
  #allocation4 [shape = 'f32[2,32]{1,0:T(2,128)}', space=vmem, size = 0x400, scoped, tag = 'scratch operand']
  %s0 = inlined_call_operand.vmem [shape: f32[2,8,32], index: 0, kind: input, shape index: {}]
  %s1 = inlined_call_operand.vmem [shape: f32[32,16], index: 1, kind: input, shape index: {}]
  %s2 = inlined_call_operand.vmem [shape: f32[1,16], index: 2, kind: input, shape index: {}]
  %s3 = inlined_call_operand.vmem [shape: f32[1,16], index: 3, kind: input, shape index: {}]
  %s4 = inlined_call_operand.vmem [shape: f32[2,8], index: 4, kind: input, shape index: {}]
  %s5 = inlined_call_operand.hbm [shape: f32[2,32], index: 5, kind: output, shape index: {}]
  %s6 = sld [smem:[#allocation0]]
  $region38: #{tpu_custom_call.1} parent=0
    _
  %s8 = ssub.s32 1, %s6
  %s9 = scalar_select 0, %s8, %s6
  $region1: #{tpu_custom_call.1} parent=0
    #allocation5 [shape = 'u8[1024]{0}', space=vmem, size = 0x400, scoped, tag = 'output window, operand 0, single buffered']
    #allocation6 [shape = 's32[1]{0}', space=sflag, size = 0x4, scoped, tag = 'scoped memory for tpu_custom_call.1']
    %10 = vsyncpa [#allocation6], 0
    // Predicated region
    $region2: #{tpu_custom_call.1} parent=1 // pred_check
      _
    $region3: #{tpu_custom_call.1} parent=1 // pred_check_branch
      %12 = sbr.rel (0) target = $region5
    $region4: #{tpu_custom_call.1} parent=1 // pred_region
      _
    $region5: #{tpu_custom_call.1} parent=1 // pred_fallthru
      _
    // Predicated region
    $region6: #{tpu_custom_call.1} parent=1 // pred_check
      _
    $region7: #{tpu_custom_call.1} parent=1 // pred_check_branch
      %14 = sbr.rel (0) target = $region9
    $region8: #{tpu_custom_call.1} parent=1 // pred_region
      _
    $region9: #{tpu_custom_call.1} parent=1 // pred_fallthru
      _
    // Predicated region
    $region10: #{tpu_custom_call.1} parent=1 // pred_check
      _
    $region11: #{tpu_custom_call.1} parent=1 // pred_check_branch
      %16 = sbr.rel (0) target = $region13
    $region12: #{tpu_custom_call.1} parent=1 // pred_region
      _
    $region13: #{tpu_custom_call.1} parent=1 // pred_fallthru
      _
    // Predicated region
    $region14: #{tpu_custom_call.1} parent=1 // pred_check
      _
    $region15: #{tpu_custom_call.1} parent=1 // pred_check_branch
      %18 = sbr.rel (0) target = $region17
    $region16: #{tpu_custom_call.1} parent=1 // pred_region
      _
    $region17: #{tpu_custom_call.1} parent=1 // pred_fallthru
      _
    // Predicated region
    $region18: #{tpu_custom_call.1} parent=1 // pred_check
      _
    $region19: #{tpu_custom_call.1} parent=1 // pred_check_branch
      %20 = sbr.rel (0) target = $region21
    $region20: #{tpu_custom_call.1} parent=1 // pred_region
      _
    $region21: #{tpu_custom_call.1} parent=1 // pred_fallthru
      _
    %p21 = scmp.eq.s32.totalorder 0, 0
    // Predicated region
    $region22: #{tpu_custom_call.1} parent=1 // pred_check
      %p22 = pneg %p21
    $region23: #{tpu_custom_call.1} parent=1 // pred_check_branch
      %24 = sbr.rel (%p22) target = $region25
    $region24: #{tpu_custom_call.1} parent=1 // pred_region
      %vm25 = vcmask 1024
      %26 = vst.msk [vmem:[#allocation2] sm:$0x3] %vm25, -inf
      %27 = vst.msk [vmem:[#allocation3] sm:$0x3] %vm25, 0.0
      %vm28 = vcmask 254976
      %29 = vst.msk [vmem:[#allocation4] sm:$0x3] %vm28, 0.0
    $region25: #{tpu_custom_call.1} parent=1 // pred_fallthru
      _
    %v30 = vld [vmem:[%s0] sm:$0xff]
    %v31 = vld [vmem:[%s0 + $0x8] sm:$0xff]
    %v32 = vld [vmem:[%s1] sm:$0xff]
    %v33 = vld [vmem:[%s1 + $0x8] sm:$0xff]
    %v34 = vld [vmem:[%s1 + $0x10] sm:$0xff]
    %v35 = vld [vmem:[%s1 + $0x18] sm:$0xff]
    %v36 = vld [vmem:[%s2] sm:$0x1]
    %v38 = vlaneseq
    %v39 = vshrl.u32 %v38, 7
    %v40 = vsub.s32 0, %v39
    %v41 = vrot.slane %v36, %v40
    %vm43 = vcmask 261120
    %v45 = vsel %vm43, %v30, 0
    %v48 = vsel %vm43, %v31, 0
    %50 = vmatprep.subr.mxu0 0.0
    %51 = vmatpush1.msra.mxu0 %v32
    %52 = vmatprep.subr.mxu0 0.0
    %53 = vmatpush1.msra.mxu0 %v33
    %54 = vmatprep.subr.mxu0 0.0
    %55 = vmatpush1.msra.mxu0 %v34
    %56 = vmatprep.subr.mxu0 0.0
    %57 = vmatpush1.msra.mxu0 %v35
    %58 = vmatprep.subr.mxu0 0.0
    %59 = vmatpush1.msra.mxu0 0.0
    %60 = vmatprep.subr.mxu0 0.0
    %61 = vmatpush1.msra.mxu0 0.0
    %62 = vmatprep.subr.mxu0 0.0
    %63 = vmatpush1.msra.mxu0 0.0
    %64 = vmatprep.subr.mxu0 0.0
    %65 = vmatpush1.msra.mxu0 0.0
    %66 = vmatprep.subr.mxu0 0.0
    %67 = vmatpush1.msra.mxu0 0.0
    %68 = vmatprep.subr.mxu0 0.0
    %69 = vmatpush1.msra.mxu0 0.0
    %70 = vmatprep.subr.mxu0 0.0
    %71 = vmatpush1.msra.mxu0 0.0
    %72 = vmatprep.subr.mxu0 0.0
    %73 = vmatpush1.msra.mxu0 0.0
    %74 = vmatprep.subr.mxu0 0.0
    %75 = vmatpush1.msra.mxu0 0.0
    %76 = vmatprep.subr.mxu0 0.0
    %77 = vmatpush1.msra.mxu0 0.0
    %78 = vmatprep.subr.mxu0 0.0
    %79 = vmatpush1.msra.mxu0 0.0
    %80 = vmatprep.subr.mxu0 0.0
    %81 = vmatpush1.msra.mxu0 0.0
    %82 = vmatprep.subr.mxu0 0.0
    %83 = vmatpush1.msra.mxu0 0.0
    %84 = vmatprep.subr.mxu0 0.0
    %85 = vmatpush1.msra.mxu0 0.0
    %86 = vmatprep.subr.mxu0 0.0
    %87 = vmatpush1.msra.mxu0 0.0
    %88 = vmatprep.subr.mxu0 0.0
    %89 = vmatpush1.msra.mxu0 0.0
    %90 = vmatprep.subr.mxu0 0.0
    %91 = vmatpush1.msra.mxu0 0.0
    %92 = vmatprep.subr.mxu0 0.0
    %93 = vmatpush1.msra.mxu0 0.0
    %94 = vmatprep.subr.mxu0 0.0
    %95 = vmatpush1.msra.mxu0 0.0
    %96 = vmatprep.subr.mxu0 0.0
    %97 = vmatpush1.msra.mxu0 0.0
    %98 = vmatprep.subr.mxu0 0.0
    %99 = vmatpush1.msra.mxu0 0.0
    %100 = vmatprep.subr.mxu0 0.0
    %101 = vmatpush1.msra.mxu0 0.0
    %102 = vmatprep.subr.mxu0 0.0
    %103 = vmatpush1.msra.mxu0 0.0
    %104 = vmatprep.subr.mxu0 0.0
    %105 = vmatpush1.msra.mxu0 0.0
    %106 = vmatprep.subr.mxu0 0.0
    %107 = vmatpush1.msra.mxu0 0.0
    %108 = vmatprep.subr.mxu0 0.0
    %109 = vmatpush1.msra.mxu0 0.0
    %110 = vmatprep.subr.mxu0 0.0
    %111 = vmatpush1.msra.mxu0 0.0
    %112 = vmatprep.subr.mxu0 0.0
    %113 = vmatpush1.msra.mxu0 0.0
    %114 = vmatprep.mubr.f32.mxu0 0.0
    %115 = vmatmul.mubr.f32.gmra.mrb[0].mxu0 %v45
    %v116 = vpop.f32.mrb[0].mxu0
    %v117 = vadd.f32 %v41, %v116
    %v118 = vpop.f32.mrb[0].mxu0
    %119 = vmatprep.mubr.f32.mxu0 0.0
    %120 = vmatmul.mubr.f32.gmra.mrb[0].mxu0 %v48
    %v121 = vpop.f32.mrb[0].mxu0
    %v122 = vadd.f32 %v41, %v121
    %v123 = vpop.f32.mrb[0].mxu0
    %124 = vdwg.mxu0
    %v125 = vtanh.pop %v117
    %v126 = vtanh.pop %v122
    %v127 = vld [vmem:[%s3] sm:$0x1]
    %v129 = vlaneseq
    %v130 = vshrl.u32 %v129, 7
    %v131 = vsub.s32 0, %v130
    %v132 = vrot.slane %v127, %v131
    %v134 = vmul.f32 %v125, %v132
    %v135 = vmul.f32 %v126, %v132
    %vm136 = vcmask 130048
    %v137 = vsel %vm136, %v134, 0.0
    %138 = vadd.xlane.f32.xlu0 %v137
    %v139 = vpop.xlane.xlu0 %138
    %v140 = vsel %vm136, %v135, 0.0
    %141 = vadd.xlane.f32.xlu0 %v140
    %v142 = vpop.xlane.xlu0 %141
    %v143 = vld [vmem:[%s4] sm:$0x3]
    %vm144 = vcmp.eq.f32.partialorder %v143, 0.0
    %v147 = vlaneseq
    %v148 = vand.u32 %v147, 127
    %v149 = vlaneseq
    %v150 = vshrl.u32 %v149, 7
    %v151 = vsub.s32 %v148, %v150
    %v152 = vrot.slane %v139, %v151
    %v153 = vlaneseq
    %v154 = vshrl.u32 %v153, 7
    %v155 = vsub.s32 %v148, %v154
    %v156 = vrot.slane %v142, %v155
    %vm157 = vcmask 1041409
    %v158 = vsel %vm157, %v156, %v152
    %v160 = vsel %vm144, 1e-09, %v158
    %v161 = vld [vmem:[#allocation2] sm:$0x3]
    %vm162 = vcmask 58368
    %v163 = vsel %vm162, %v160, -inf
    %164 = vmax.xlane.f32.xlu0 %v163
    %v165 = vpop.xlane.xlu0 %164
    %v166 = vmax.f32 %v161, %v165
    %v167 = vsub.f32 %v161, %v166
    %v168 = vmul.f32 %v167, 1.442695
    %v169 = vpow.pop %v168
    %171 = vset.pattern.permute.xlu0 0
    %172 = vperm.xlu0 %171, %v166
    %v173 = vpop.permute.xlu0 %172
    %v175 = vsub.f32 %v160, %v173
    %v176 = vmul.f32 %v175, 1.442695
    %v177 = vpow.pop %v176
    %v178 = vld [vmem:[#allocation3] sm:$0x3]
    %v179 = vmul.f32 %v169, %v178
    %v180 = vsel %vm162, %v177, 0.0
    %181 = vadd.xlane.f32.xlu0 %v180
    %v182 = vpop.xlane.xlu0 %181
    %v183 = vadd.f32 %v179, %v182
    %vm184 = vcmask 1024
    %185 = vst.msk [vmem:[#allocation3] sm:$0x3] %vm184, %v183
    %186 = vst.msk [vmem:[#allocation2] sm:$0x3] %vm184, %v166
    %v187 = vld [vmem:[#allocation4] sm:$0x3]
    %189 = vset.pattern.permute.xlu0 0
    %190 = vperm.xlu0 %189, %v169
    %v191 = vpop.permute.xlu0 %190
    %v193 = vmul.f32 %v191, %v187
    %v194 = vlaneseq
    %v195 = vshrl.u32 %v194, 7
    %v196 = vsub.s32 0, %v195
    %v197 = vrot.slane %v177, %v196
    %199 = vbcast.lane.b32.xlu0 %v197, 256
    %v200 = vpop.permute.xlu0 %199
    %v201 = vlaneseq
    %v202 = vshrl.u32 %v201, 7
    %v203 = vsub.s32 1, %v202
    %v204 = vrot.slane %v177, %v203
    %206 = vbcast.lane.b32.xlu0 %v204, 256
    %v207 = vpop.permute.xlu0 %206
    %v208 = vmul.f32 %v30, %v200
    %v209 = vmul.f32 %v31, %v207
    %v210 = vsel %vm43, %v208, 0.0
    %v211 = vrot.slane %v210, 4
    %v212 = vadd.f32 %v210, %v211
    %v213 = vrot.slane %v212, 2
    %v214 = vadd.f32 %v212, %v213
    %v215 = vrot.slane %v214, 1
    %v216 = vadd.f32 %v214, %v215
    %v217 = vsel %vm43, %v209, 0.0
    %v218 = vrot.slane %v217, 4
    %v219 = vadd.f32 %v217, %v218
    %v220 = vrot.slane %v219, 2
    %v221 = vadd.f32 %v219, %v220
    %v222 = vrot.slane %v221, 1
    %v223 = vadd.f32 %v221, %v222
    %v226 = vsel %vm157, %v223, %v216
    %v228 = vadd.f32 %v193, %v226
    %vm229 = vcmask 254976
    %230 = vst.msk [vmem:[#allocation4] sm:$0x3] %vm229, %v228
    // Predicated region
    $region26: #{tpu_custom_call.1} parent=1 // pred_check
      %p231 = pneg %p21
    $region27: #{tpu_custom_call.1} parent=1 // pred_check_branch
      %233 = sbr.rel (%p231) target = $region29
    $region28: #{tpu_custom_call.1} parent=1 // pred_region
      %v234 = vld [vmem:[#allocation4] sm:$0x3]
      %v235 = vld [vmem:[#allocation3] sm:$0x3]
      %v236 = vrcp.pop %v235
      %238 = vset.pattern.permute.xlu0 0
      %239 = vperm.xlu0 %238, %v236
      %v240 = vpop.permute.xlu0 %239
      %v242 = vmul.f32 %v234, %v240
      %243 = vst.msk [vmem:[#allocation5] sm:$0x3] %vm229, %v242
    $region29: #{tpu_custom_call.1} parent=1 // pred_fallthru
      _
    // Predicated region
    $region30: #{tpu_custom_call.1} parent=1 // pred_check
      _
    $region31: #{tpu_custom_call.1} parent=1 // pred_check_branch
      %245 = sbr.rel (0) target = $region33
    $region32: #{tpu_custom_call.1} parent=1 // pred_region
      %s247 = ssub.s32 32, 32
      %248 = vsyncadd [#allocation6], %s247
      %s250 = sshll.u32 [#allocation5], 4
      %s251 = int_to_ptr.vmem [resolvable:$true] %s250
      %253 = dma.vmem_to_hbm [thread:$0]  %s251, 32, %s5, [#allocation6]
    $region33: #{tpu_custom_call.1} parent=1 // pred_fallthru
      _
    // Predicated region
    $region34: #{tpu_custom_call.1} parent=1 // pred_check
      _
    $region35: #{tpu_custom_call.1} parent=1 // pred_check_branch
      %255 = sbr.rel (0) target = $region37
    $region36: #{tpu_custom_call.1} parent=1 // pred_region
      %256 = dma.done [#allocation6], 32
    $region37: #{tpu_custom_call.1} parent=1 // pred_fallthru
      _
    %257 = vsyncpa [#allocation6], 1

</llo_original>
